<compile_context>
chip_gen: v6e
topology: v6e:2x2x1
jax: 0.10.0
libtpu: 0.0.40
codegen_flags: <defaults>
</compile_context>

<pallas_src>
import functools

import jax
import jax.numpy as jnp
from jax.experimental import pallas as pl
from jax.experimental.pallas import tpu as pltpu


def _head_kernel(f_ref, w_ref, b_ref, o_ref):
    """Global-average-pool (scale pre-folded into W) + Linear for one B-tile.

    f_ref: [TB, S, C]   f32 features (VMEM)
    w_ref: [C, Npad]    f32 weight * (1/S) (VMEM, lane-dense, zero-padded)
    b_ref: [1, Npad]    f32 bias (VMEM, zero-padded)
    o_ref: [TB, Npad]   f32 logits (VMEM, lane-dense)
    """
    pooled = jnp.sum(f_ref[...], axis=1)              # [TB, C] sublane reduce (XLU)
    o_ref[...] = (
        jnp.dot(pooled, w_ref[...], preferred_element_type=jnp.float32)
        + b_ref[...]
    )


@functools.lru_cache(maxsize=1)
def _vmem_capacity_bytes():
    try:
        return int(pltpu.get_tpu_info().vmem_capacity_bytes)
    except Exception:
        return 64 * 1024 * 1024   # conservative (v7x-sized) fallback


def classifier_head(features, weight, bias):
    """features: [B, S, C] f32, weight: [C, N] f32, bias: [N] f32 -> [B, N] f32."""
    B, S, C = features.shape
    N = weight.shape[1]

    # Lane-dense class dimension: pad N up to a multiple of 128, and fold the
    # 1/S pooling scale into the (constant, tiny) weight once.
    n_pad = ((N + 127) // 128) * 128
    w_p = jnp.zeros((C, n_pad), jnp.float32).at[:, :N].set(weight * (1.0 / S))
    b_p = jnp.zeros((1, n_pad), jnp.float32).at[0, :N].set(bias)

    # Batch tiling: exact tile at small batch (no wasted DMA); for large
    # batches 64 rows on 128-MiB-VMEM chips (v5e/v6e), 32 rows on v7x (64 MiB).
    vmem_cap = _vmem_capacity_bytes()
    tb_large = 64 if vmem_cap >= (128 << 20) else 32
    tb = B if B <= tb_large else tb_large

    # Explicit scoped-VMEM budget: double-buffered feature tiles dominate
    # (S pads 49 -> 56 sublanes for f32), plus resident weight/bias/out.
    s_pad = -(-S // 8) * 8
    feat_buf = tb * s_pad * C * 4
    wgt_buf = C * n_pad * 4
    out_buf = tb * n_pad * 4
    vmem_limit = int(min(
        max(2 * (feat_buf + wgt_buf + out_buf) + (8 << 20), 32 << 20),
        int(vmem_cap * 0.75),
    ))

    out = pl.pallas_call(
        _head_kernel,
        out_shape=jax.ShapeDtypeStruct((B, n_pad), jnp.float32),
        grid_spec=pltpu.PrefetchScalarGridSpec(
            num_scalar_prefetch=0,
            grid=(pl.cdiv(B, tb),),                              # edge block clipped
            in_specs=[
                pl.BlockSpec((tb, S, C), lambda i: (i, 0, 0)),   # batch tile
                pl.BlockSpec((C, n_pad), lambda i: (0, 0)),      # weight, resident
                pl.BlockSpec((1, n_pad), lambda i: (0, 0)),      # bias, resident
            ],
            out_specs=pl.BlockSpec((tb, n_pad), lambda i: (i, 0)),
        ),
        compiler_params=pltpu.CompilerParams(
            dimension_semantics=("parallel",),    # shards B tiles across v7x's 2 TCs
            vmem_limit_bytes=vmem_limit,
        ),
    )(features, w_p, b_p)

    return out[:, :N]


classifier_head_jit = jax.jit(classifier_head)


if __name__ == "__main__":
    num_class = 60
    feat_dim = 1280          # matches nn.Linear(1280, num_class)
    B = 2                    # small batch
    S = 49                   # 7x7 pre-classifier spatial positions, flattened

    key = jax.random.PRNGKey(0)
    k_feat, k_w = jax.random.split(key)

    # Deterministic stand-in for the backbone's pre-classifier feature map.
    features = jax.random.normal(k_feat, (B, S, feat_dim), dtype=jnp.float32)

    # Replaced last_linear parameters: weight ~ N(0, 0.001), bias = 0.
    std = 0.001
    weight = std * jax.random.normal(k_w, (feat_dim, num_class), dtype=jnp.float32)
    bias = jnp.zeros((num_class,), dtype=jnp.float32)

    out = classifier_head_jit(features, weight, bias)
    out = jax.block_until_ready(out)

    # Reference check in plain JAX (full f32 path -> tight tolerance).
    ref = jnp.mean(features, axis=1) @ weight + bias
    assert out.shape == (B, num_class)
    assert jnp.allclose(out, ref, atol=1e-5, rtol=1e-4)

    print("KERNEL_OK")
</pallas_src>

<mosaic_0001>
module attributes {stable_mosaic.version = 11 : i64} {
  func.func @_head_kernel(%arg0: i32, %arg1: memref<2x49x1280xf32, #tpu.memory_space<vmem>>, %arg2: memref<1280x128xf32, #tpu.memory_space<vmem>>, %arg3: memref<1x128xf32, #tpu.memory_space<vmem>>, %arg4: memref<2x128xf32, #tpu.memory_space<vmem>>) attributes {dimension_semantics = [#tpu.dimension_semantics<parallel>], iteration_bounds = array<i64: 1>, scalar_prefetch = 0 : i64, scratch_operands = 0 : i64, tpu.core_type = #tpu.core_type<tc>, window_params = [{transform_indices = @transform_0, window_bounds = array<i64: 2, 49, 1280>}, {pipeline_mode = #tpu.pipeline_mode<synchronous>, transform_indices = @transform_1, window_bounds = array<i64: 1280, 128>}, {pipeline_mode = #tpu.pipeline_mode<synchronous>, transform_indices = @transform_2, window_bounds = array<i64: 1, 128>}, {transform_indices = @transform_3, window_bounds = array<i64: 2, 128>}]} {
    %c0 = arith.constant 0 : index
    %c0_0 = arith.constant 0 : index
    %c0_1 = arith.constant 0 : index
    %0 = vector.load %arg1[%c0, %c0_0, %c0_1] : memref<2x49x1280xf32, #tpu.memory_space<vmem>>, vector<2x49x1280xf32>
    %cst = arith.constant dense<0.000000e+00> : vector<2x1280xf32>
    %1 = vector.multi_reduction <add>, %0, %cst [1] : vector<2x49x1280xf32> to vector<2x1280xf32>
    %c0_2 = arith.constant 0 : index
    %c0_3 = arith.constant 0 : index
    %2 = vector.load %arg2[%c0_2, %c0_3] : memref<1280x128xf32, #tpu.memory_space<vmem>>, vector<1280x128xf32>
    %cst_4 = arith.constant dense<0.000000e+00> : vector<2x128xf32>
    %3 = tpu.matmul %1, %2, %cst_4 {dimension_numbers = #tpu.dot_dimension_numbers<[1], [0], [0], [1], [0, 0, 1, 1], [], []>} : vector<2x1280xf32>, vector<1280x128xf32>, vector<2x128xf32> -> vector<2x128xf32>
    %c0_5 = arith.constant 0 : index
    %c0_6 = arith.constant 0 : index
    %4 = vector.load %arg3[%c0_5, %c0_6] : memref<1x128xf32, #tpu.memory_space<vmem>>, vector<1x128xf32>
    %5 = vector.broadcast %4 : vector<1x128xf32> to vector<2x128xf32>
    %6 = arith.addf %3, %5 : vector<2x128xf32>
    %c0_7 = arith.constant 0 : index
    %c0_8 = arith.constant 0 : index
    %7 = vector.load %arg4[%c0_7, %c0_8] : memref<2x128xf32, #tpu.memory_space<vmem>>, vector<2x128xf32>
    tpu.vector_store %arg4[%c0_7, %c0_8], %6 {strides = array<i32>} : memref<2x128xf32, #tpu.memory_space<vmem>>, vector<2x128xf32>,
    return
  }
  func.func @transform_0(%arg0: i32) -> (i32, i32, i32) {
    %c0_i32 = arith.constant 0 : i32
    %c0_i32_0 = arith.constant 0 : i32
    %c0_i32_1 = arith.constant 0 : i32
    return %arg0, %c0_i32, %c0_i32_0 : i32, i32, i32
  }
  func.func @transform_1(%arg0: i32) -> (i32, i32) {
    %c0_i32 = arith.constant 0 : i32
    %c0_i32_0 = arith.constant 0 : i32
    %c0_i32_1 = arith.constant 0 : i32
    return %c0_i32, %c0_i32_0 : i32, i32
  }
  func.func @transform_2(%arg0: i32) -> (i32, i32) {
    %c0_i32 = arith.constant 0 : i32
    %c0_i32_0 = arith.constant 0 : i32
    %c0_i32_1 = arith.constant 0 : i32
    return %c0_i32, %c0_i32_0 : i32, i32
  }
  func.func @transform_3(%arg0: i32) -> (i32, i32) {
    %c0_i32 = arith.constant 0 : i32
    %c0_i32_0 = arith.constant 0 : i32
    return %arg0, %c0_i32 : i32, i32
  }
}

</mosaic_0001>

<llo_original>
// kernel: classifier_head.1
$region0: #{classifier_head.1}
  #allocation0 [shape = 'u32[]', space=smem, size = 0x4, offset = 0x4, fixed_abs, tag = 'smem constant byte address 0x4 - core index']
  #allocation1 [shape = 'u32[144,128]{1,0:T(1,128)}', space=vmem, size = 0x12000, scoped, tag = 'internal scratch']
  %s0 = inlined_call_operand.vmem [shape: f32[2,49,1280], index: 0, kind: input, shape index: {}]
  %s1 = inlined_call_operand.vmem [shape: f32[1280,128], index: 1, kind: input, shape index: {}]
  %s2 = inlined_call_operand.vmem [shape: f32[1,128], index: 2, kind: input, shape index: {}]
  %s3 = inlined_call_operand.hbm [shape: f32[2,128], index: 3, kind: output, shape index: {}]
  %s4 = sld [smem:[#allocation0]]
  $region22: #{classifier_head.1} parent=0
    _
  %s6 = ssub.s32 1, %s4
  %s7 = scalar_select 0, %s6, %s4
  $region1: #{classifier_head.1} parent=0
    #allocation2 [shape = 'u8[1024]{0}', space=vmem, size = 0x400, scoped, tag = 'output window, operand 0, single buffered']
    #allocation3 [shape = 's32[1]{0}', space=sflag, size = 0x4, scoped, tag = 'scoped memory for classifier_head.1']
    %8 = vsyncpa [#allocation3], 0
    // Predicated region
    $region2: #{classifier_head.1} parent=1 // pred_check
      _
    $region3: #{classifier_head.1} parent=1 // pred_check_branch
      %10 = sbr.rel (0) target = $region5
    $region4: #{classifier_head.1} parent=1 // pred_region
      _
    $region5: #{classifier_head.1} parent=1 // pred_fallthru
      _
    // Predicated region
    $region6: #{classifier_head.1} parent=1 // pred_check
      _
    $region7: #{classifier_head.1} parent=1 // pred_check_branch
      %12 = sbr.rel (0) target = $region9
    $region8: #{classifier_head.1} parent=1 // pred_region
      _
    $region9: #{classifier_head.1} parent=1 // pred_fallthru
      _
    // Predicated region
    $region10: #{classifier_head.1} parent=1 // pred_check
      _
    $region11: #{classifier_head.1} parent=1 // pred_check_branch
      %14 = sbr.rel (0) target = $region13
    $region12: #{classifier_head.1} parent=1 // pred_region
      _
    $region13: #{classifier_head.1} parent=1 // pred_fallthru
      _
    %v15 = vld [vmem:[%s0] sm:$0xff]
    %v16 = vld [vmem:[%s0 + $0x8] sm:$0xff]
    %v17 = vld [vmem:[%s0 + $0x10] sm:$0xff]
    %v18 = vld [vmem:[%s0 + $0x18] sm:$0xff]
    %v19 = vld [vmem:[%s0 + $0x20] sm:$0xff]
    %v20 = vld [vmem:[%s0 + $0x28] sm:$0xff]
    %v21 = vld [vmem:[%s0 + $0x30] sm:$0xff]
    %v22 = vld [vmem:[%s0 + $0x38] sm:$0xff]
    %v23 = vld [vmem:[%s0 + $0x40] sm:$0xff]
    %v24 = vld [vmem:[%s0 + $0x48] sm:$0xff]
    %v25 = vld [vmem:[%s0 + $0x50] sm:$0xff]
    %v26 = vld [vmem:[%s0 + $0x58] sm:$0xff]
    %v27 = vld [vmem:[%s0 + $0x60] sm:$0xff]
    %v28 = vld [vmem:[%s0 + $0x68] sm:$0xff]
    %v29 = vld [vmem:[%s0 + $0x70] sm:$0xff]
    %v30 = vld [vmem:[%s0 + $0x78] sm:$0xff]
    %v31 = vld [vmem:[%s0 + $0x80] sm:$0xff]
    %v32 = vld [vmem:[%s0 + $0x88] sm:$0xff]
    %v33 = vld [vmem:[%s0 + $0x90] sm:$0xff]
    %v34 = vld [vmem:[%s0 + $0x98] sm:$0xff]
    %v35 = vld [vmem:[%s0 + $0xa0] sm:$0xff]
    %v36 = vld [vmem:[%s0 + $0xa8] sm:$0xff]
    %v37 = vld [vmem:[%s0 + $0xb0] sm:$0xff]
    %v38 = vld [vmem:[%s0 + $0xb8] sm:$0xff]
    %v39 = vld [vmem:[%s0 + $0xc0] sm:$0xff]
    %v40 = vld [vmem:[%s0 + $0xc8] sm:$0xff]
    %v41 = vld [vmem:[%s0 + $0xd0] sm:$0xff]
    %v42 = vld [vmem:[%s0 + $0xd8] sm:$0xff]
    %v43 = vld [vmem:[%s0 + $0xe0] sm:$0xff]
    %v44 = vld [vmem:[%s0 + $0xe8] sm:$0xff]
    %v45 = vld [vmem:[%s0 + $0xf0] sm:$0xff]
    %v46 = vld [vmem:[%s0 + $0xf8] sm:$0xff]
    %v47 = vld [vmem:[%s0 + $0x100] sm:$0xff]
    %v48 = vld [vmem:[%s0 + $0x108] sm:$0xff]
    %v49 = vld [vmem:[%s0 + $0x110] sm:$0xff]
    %v50 = vld [vmem:[%s0 + $0x118] sm:$0xff]
    %v51 = vld [vmem:[%s0 + $0x120] sm:$0xff]
    %v52 = vld [vmem:[%s0 + $0x128] sm:$0xff]
    %v53 = vld [vmem:[%s0 + $0x130] sm:$0xff]
    %v54 = vld [vmem:[%s0 + $0x138] sm:$0xff]
    %v55 = vld [vmem:[%s0 + $0x140] sm:$0xff]
    %v56 = vld [vmem:[%s0 + $0x148] sm:$0xff]
    %v57 = vld [vmem:[%s0 + $0x150] sm:$0xff]
    %v58 = vld [vmem:[%s0 + $0x158] sm:$0xff]
    %v59 = vld [vmem:[%s0 + $0x160] sm:$0xff]
    %v60 = vld [vmem:[%s0 + $0x168] sm:$0xff]
    %v61 = vld [vmem:[%s0 + $0x170] sm:$0xff]
    %v62 = vld [vmem:[%s0 + $0x178] sm:$0xff]
    %v63 = vld [vmem:[%s0 + $0x180] sm:$0xff]
    %v64 = vld [vmem:[%s0 + $0x188] sm:$0xff]
    %v65 = vld [vmem:[%s0 + $0x190] sm:$0xff]
    %v66 = vld [vmem:[%s0 + $0x198] sm:$0xff]
    %v67 = vld [vmem:[%s0 + $0x1a0] sm:$0xff]
    %v68 = vld [vmem:[%s0 + $0x1a8] sm:$0xff]
    %v69 = vld [vmem:[%s0 + $0x1b0] sm:$0xff]
    %v70 = vld [vmem:[%s0 + $0x1b8] sm:$0xff]
    %v71 = vld [vmem:[%s0 + $0x1c0] sm:$0xff]
    %v72 = vld [vmem:[%s0 + $0x1c8] sm:$0xff]
    %v73 = vld [vmem:[%s0 + $0x1d0] sm:$0xff]
    %v74 = vld [vmem:[%s0 + $0x1d8] sm:$0xff]
    %v75 = vld [vmem:[%s0 + $0x1e0] sm:$0x1]
    %v76 = vld [vmem:[%s0 + $0x1e8] sm:$0x1]
    %v77 = vld [vmem:[%s0 + $0x1f0] sm:$0x1]
    %v78 = vld [vmem:[%s0 + $0x1f8] sm:$0x1]
    %v79 = vld [vmem:[%s0 + $0x200] sm:$0x1]
    %v80 = vld [vmem:[%s0 + $0x208] sm:$0x1]
    %v81 = vld [vmem:[%s0 + $0x210] sm:$0x1]
    %v82 = vld [vmem:[%s0 + $0x218] sm:$0x1]
    %v83 = vld [vmem:[%s0 + $0x220] sm:$0x1]
    %v84 = vld [vmem:[%s0 + $0x228] sm:$0x1]
    %v85 = vld [vmem:[%s0 + $0x230] sm:$0xff]
    %v86 = vld [vmem:[%s0 + $0x238] sm:$0xff]
    %v87 = vld [vmem:[%s0 + $0x240] sm:$0xff]
    %v88 = vld [vmem:[%s0 + $0x248] sm:$0xff]
    %v89 = vld [vmem:[%s0 + $0x250] sm:$0xff]
    %v90 = vld [vmem:[%s0 + $0x258] sm:$0xff]
    %v91 = vld [vmem:[%s0 + $0x260] sm:$0xff]
    %v92 = vld [vmem:[%s0 + $0x268] sm:$0xff]
    %v93 = vld [vmem:[%s0 + $0x270] sm:$0xff]
    %v94 = vld [vmem:[%s0 + $0x278] sm:$0xff]
    %v95 = vld [vmem:[%s0 + $0x280] sm:$0xff]
    %v96 = vld [vmem:[%s0 + $0x288] sm:$0xff]
    %v97 = vld [vmem:[%s0 + $0x290] sm:$0xff]
    %v98 = vld [vmem:[%s0 + $0x298] sm:$0xff]
    %v99 = vld [vmem:[%s0 + $0x2a0] sm:$0xff]
    %v100 = vld [vmem:[%s0 + $0x2a8] sm:$0xff]
    %v101 = vld [vmem:[%s0 + $0x2b0] sm:$0xff]
    %v102 = vld [vmem:[%s0 + $0x2b8] sm:$0xff]
    %v103 = vld [vmem:[%s0 + $0x2c0] sm:$0xff]
    %v104 = vld [vmem:[%s0 + $0x2c8] sm:$0xff]
    %v105 = vld [vmem:[%s0 + $0x2d0] sm:$0xff]
    %v106 = vld [vmem:[%s0 + $0x2d8] sm:$0xff]
    %v107 = vld [vmem:[%s0 + $0x2e0] sm:$0xff]
    %v108 = vld [vmem:[%s0 + $0x2e8] sm:$0xff]
    %v109 = vld [vmem:[%s0 + $0x2f0] sm:$0xff]
    %v110 = vld [vmem:[%s0 + $0x2f8] sm:$0xff]
    %v111 = vld [vmem:[%s0 + $0x300] sm:$0xff]
    %v112 = vld [vmem:[%s0 + $0x308] sm:$0xff]
    %v113 = vld [vmem:[%s0 + $0x310] sm:$0xff]
    %v114 = vld [vmem:[%s0 + $0x318] sm:$0xff]
    %v115 = vld [vmem:[%s0 + $0x320] sm:$0xff]
    %v116 = vld [vmem:[%s0 + $0x328] sm:$0xff]
    %v117 = vld [vmem:[%s0 + $0x330] sm:$0xff]
    %v118 = vld [vmem:[%s0 + $0x338] sm:$0xff]
    %v119 = vld [vmem:[%s0 + $0x340] sm:$0xff]
    %v120 = vld [vmem:[%s0 + $0x348] sm:$0xff]
    %v121 = vld [vmem:[%s0 + $0x350] sm:$0xff]
    %v122 = vld [vmem:[%s0 + $0x358] sm:$0xff]
    %v123 = vld [vmem:[%s0 + $0x360] sm:$0xff]
    %v124 = vld [vmem:[%s0 + $0x368] sm:$0xff]
    %v125 = vld [vmem:[%s0 + $0x370] sm:$0xff]
    %v126 = vld [vmem:[%s0 + $0x378] sm:$0xff]
    %v127 = vld [vmem:[%s0 + $0x380] sm:$0xff]
    %v128 = vld [vmem:[%s0 + $0x388] sm:$0xff]
    %v129 = vld [vmem:[%s0 + $0x390] sm:$0xff]
    %v130 = vld [vmem:[%s0 + $0x398] sm:$0xff]
    %v131 = vld [vmem:[%s0 + $0x3a0] sm:$0xff]
    %v132 = vld [vmem:[%s0 + $0x3a8] sm:$0xff]
    %v133 = vld [vmem:[%s0 + $0x3b0] sm:$0xff]
    %v134 = vld [vmem:[%s0 + $0x3b8] sm:$0xff]
    %v135 = vld [vmem:[%s0 + $0x3c0] sm:$0xff]
    %v136 = vld [vmem:[%s0 + $0x3c8] sm:$0xff]
    %v137 = vld [vmem:[%s0 + $0x3d0] sm:$0xff]
    %v138 = vld [vmem:[%s0 + $0x3d8] sm:$0xff]
    %v139 = vld [vmem:[%s0 + $0x3e0] sm:$0xff]
    %v140 = vld [vmem:[%s0 + $0x3e8] sm:$0xff]
    %v141 = vld [vmem:[%s0 + $0x3f0] sm:$0xff]
    %v142 = vld [vmem:[%s0 + $0x3f8] sm:$0xff]
    %v143 = vld [vmem:[%s0 + $0x400] sm:$0xff]
    %v144 = vld [vmem:[%s0 + $0x408] sm:$0xff]
    %v145 = vld [vmem:[%s0 + $0x410] sm:$0x1]
    %v146 = vld [vmem:[%s0 + $0x418] sm:$0x1]
    %v147 = vld [vmem:[%s0 + $0x420] sm:$0x1]
    %v148 = vld [vmem:[%s0 + $0x428] sm:$0x1]
    %v149 = vld [vmem:[%s0 + $0x430] sm:$0x1]
    %v150 = vld [vmem:[%s0 + $0x438] sm:$0x1]
    %v151 = vld [vmem:[%s0 + $0x440] sm:$0x1]
    %v152 = vld [vmem:[%s0 + $0x448] sm:$0x1]
    %v153 = vld [vmem:[%s0 + $0x450] sm:$0x1]
    %v154 = vld [vmem:[%s0 + $0x458] sm:$0x1]
    %v155 = vadd.f32 %v15, %v25
    %v156 = vadd.f32 %v155, %v35
    %v157 = vadd.f32 %v156, %v45
    %v158 = vadd.f32 %v157, %v55
    %v159 = vadd.f32 %v158, %v65
    %vm160 = vcmask 1040384
    %v161 = vsel %vm160, %v75, 0.0
    %v162 = vadd.f32 %v159, %v161
    %v163 = vrot.slane %v162, 4
    %v164 = vadd.f32 %v162, %v163
    %v165 = vrot.slane %v164, 2
    %v166 = vadd.f32 %v164, %v165
    %v167 = vrot.slane %v166, 1
    %v168 = vadd.f32 %v166, %v167
    %v169 = vadd.f32 %v16, %v26
    %v170 = vadd.f32 %v169, %v36
    %v171 = vadd.f32 %v170, %v46
    %v172 = vadd.f32 %v171, %v56
    %v173 = vadd.f32 %v172, %v66
    %v174 = vsel %vm160, %v76, 0.0
    %v175 = vadd.f32 %v173, %v174
    %v176 = vrot.slane %v175, 4
    %v177 = vadd.f32 %v175, %v176
    %v178 = vrot.slane %v177, 2
    %v179 = vadd.f32 %v177, %v178
    %v180 = vrot.slane %v179, 1
    %v181 = vadd.f32 %v179, %v180
    %v182 = vadd.f32 %v17, %v27
    %v183 = vadd.f32 %v182, %v37
    %v184 = vadd.f32 %v183, %v47
    %v185 = vadd.f32 %v184, %v57
    %v186 = vadd.f32 %v185, %v67
    %v187 = vsel %vm160, %v77, 0.0
    %v188 = vadd.f32 %v186, %v187
    %v189 = vrot.slane %v188, 4
    %v190 = vadd.f32 %v188, %v189
    %v191 = vrot.slane %v190, 2
    %v192 = vadd.f32 %v190, %v191
    %v193 = vrot.slane %v192, 1
    %v194 = vadd.f32 %v192, %v193
    %v195 = vadd.f32 %v18, %v28
    %v196 = vadd.f32 %v195, %v38
    %v197 = vadd.f32 %v196, %v48
    %v198 = vadd.f32 %v197, %v58
    %v199 = vadd.f32 %v198, %v68
    %v200 = vsel %vm160, %v78, 0.0
    %v201 = vadd.f32 %v199, %v200
    %v202 = vrot.slane %v201, 4
    %v203 = vadd.f32 %v201, %v202
    %v204 = vrot.slane %v203, 2
    %v205 = vadd.f32 %v203, %v204
    %v206 = vrot.slane %v205, 1
    %v207 = vadd.f32 %v205, %v206
    %v208 = vadd.f32 %v19, %v29
    %v209 = vadd.f32 %v208, %v39
    %v210 = vadd.f32 %v209, %v49
    %v211 = vadd.f32 %v210, %v59
    %v212 = vadd.f32 %v211, %v69
    %v213 = vsel %vm160, %v79, 0.0
    %v214 = vadd.f32 %v212, %v213
    %v215 = vrot.slane %v214, 4
    %v216 = vadd.f32 %v214, %v215
    %v217 = vrot.slane %v216, 2
    %v218 = vadd.f32 %v216, %v217
    %v219 = vrot.slane %v218, 1
    %v220 = vadd.f32 %v218, %v219
    %v221 = vadd.f32 %v20, %v30
    %v222 = vadd.f32 %v221, %v40
    %v223 = vadd.f32 %v222, %v50
    %v224 = vadd.f32 %v223, %v60
    %v225 = vadd.f32 %v224, %v70
    %v226 = vsel %vm160, %v80, 0.0
    %v227 = vadd.f32 %v225, %v226
    %v228 = vrot.slane %v227, 4
    %v229 = vadd.f32 %v227, %v228
    %v230 = vrot.slane %v229, 2
    %v231 = vadd.f32 %v229, %v230
    %v232 = vrot.slane %v231, 1
    %v233 = vadd.f32 %v231, %v232
    %v234 = vadd.f32 %v21, %v31
    %v235 = vadd.f32 %v234, %v41
    %v236 = vadd.f32 %v235, %v51
    %v237 = vadd.f32 %v236, %v61
    %v238 = vadd.f32 %v237, %v71
    %v239 = vsel %vm160, %v81, 0.0
    %v240 = vadd.f32 %v238, %v239
    %v241 = vrot.slane %v240, 4
    %v242 = vadd.f32 %v240, %v241
    %v243 = vrot.slane %v242, 2
    %v244 = vadd.f32 %v242, %v243
    %v245 = vrot.slane %v244, 1
    %v246 = vadd.f32 %v244, %v245
    %v247 = vadd.f32 %v22, %v32
    %v248 = vadd.f32 %v247, %v42
    %v249 = vadd.f32 %v248, %v52
    %v250 = vadd.f32 %v249, %v62
    %v251 = vadd.f32 %v250, %v72
    %v252 = vsel %vm160, %v82, 0.0
    %v253 = vadd.f32 %v251, %v252
    %v254 = vrot.slane %v253, 4
    %v255 = vadd.f32 %v253, %v254
    %v256 = vrot.slane %v255, 2
    %v257 = vadd.f32 %v255, %v256
    %v258 = vrot.slane %v257, 1
    %v259 = vadd.f32 %v257, %v258
    %v260 = vadd.f32 %v23, %v33
    %v261 = vadd.f32 %v260, %v43
    %v262 = vadd.f32 %v261, %v53
    %v263 = vadd.f32 %v262, %v63
    %v264 = vadd.f32 %v263, %v73
    %v265 = vsel %vm160, %v83, 0.0
    %v266 = vadd.f32 %v264, %v265
    %v267 = vrot.slane %v266, 4
    %v268 = vadd.f32 %v266, %v267
    %v269 = vrot.slane %v268, 2
    %v270 = vadd.f32 %v268, %v269
    %v271 = vrot.slane %v270, 1
    %v272 = vadd.f32 %v270, %v271
    %v273 = vadd.f32 %v24, %v34
    %v274 = vadd.f32 %v273, %v44
    %v275 = vadd.f32 %v274, %v54
    %v276 = vadd.f32 %v275, %v64
    %v277 = vadd.f32 %v276, %v74
    %v278 = vsel %vm160, %v84, 0.0
    %v279 = vadd.f32 %v277, %v278
    %v280 = vrot.slane %v279, 4
    %v281 = vadd.f32 %v279, %v280
    %v282 = vrot.slane %v281, 2
    %v283 = vadd.f32 %v281, %v282
    %v284 = vrot.slane %v283, 1
    %v285 = vadd.f32 %v283, %v284
    %v286 = vadd.f32 %v85, %v95
    %v287 = vadd.f32 %v286, %v105
    %v288 = vadd.f32 %v287, %v115
    %v289 = vadd.f32 %v288, %v125
    %v290 = vadd.f32 %v289, %v135
    %v291 = vsel %vm160, %v145, 0.0
    %v292 = vadd.f32 %v290, %v291
    %v293 = vrot.slane %v292, 4
    %v294 = vadd.f32 %v292, %v293
    %v295 = vrot.slane %v294, 2
    %v296 = vadd.f32 %v294, %v295
    %v297 = vrot.slane %v296, 1
    %v298 = vadd.f32 %v296, %v297
    %v299 = vadd.f32 %v86, %v96
    %v300 = vadd.f32 %v299, %v106
    %v301 = vadd.f32 %v300, %v116
    %v302 = vadd.f32 %v301, %v126
    %v303 = vadd.f32 %v302, %v136
    %v304 = vsel %vm160, %v146, 0.0
    %v305 = vadd.f32 %v303, %v304
    %v306 = vrot.slane %v305, 4
    %v307 = vadd.f32 %v305, %v306
    %v308 = vrot.slane %v307, 2
    %v309 = vadd.f32 %v307, %v308
    %v310 = vrot.slane %v309, 1
    %v311 = vadd.f32 %v309, %v310
    %v312 = vadd.f32 %v87, %v97
    %v313 = vadd.f32 %v312, %v107
    %v314 = vadd.f32 %v313, %v117
    %v315 = vadd.f32 %v314, %v127
    %v316 = vadd.f32 %v315, %v137
    %v317 = vsel %vm160, %v147, 0.0
    %v318 = vadd.f32 %v316, %v317
    %v319 = vrot.slane %v318, 4
    %v320 = vadd.f32 %v318, %v319
    %v321 = vrot.slane %v320, 2
    %v322 = vadd.f32 %v320, %v321
    %v323 = vrot.slane %v322, 1
    %v324 = vadd.f32 %v322, %v323
    %v325 = vadd.f32 %v88, %v98
    %v326 = vadd.f32 %v325, %v108
    %v327 = vadd.f32 %v326, %v118
    %v328 = vadd.f32 %v327, %v128
    %v329 = vadd.f32 %v328, %v138
    %v330 = vsel %vm160, %v148, 0.0
    %v331 = vadd.f32 %v329, %v330
    %v332 = vrot.slane %v331, 4
    %v333 = vadd.f32 %v331, %v332
    %v334 = vrot.slane %v333, 2
    %v335 = vadd.f32 %v333, %v334
    %v336 = vrot.slane %v335, 1
    %v337 = vadd.f32 %v335, %v336
    %v338 = vadd.f32 %v89, %v99
    %v339 = vadd.f32 %v338, %v109
    %v340 = vadd.f32 %v339, %v119
    %v341 = vadd.f32 %v340, %v129
    %v342 = vadd.f32 %v341, %v139
    %v343 = vsel %vm160, %v149, 0.0
    %v344 = vadd.f32 %v342, %v343
    %v345 = vrot.slane %v344, 4
    %v346 = vadd.f32 %v344, %v345
    %v347 = vrot.slane %v346, 2
    %v348 = vadd.f32 %v346, %v347
    %v349 = vrot.slane %v348, 1
    %v350 = vadd.f32 %v348, %v349
    %v351 = vadd.f32 %v90, %v100
    %v352 = vadd.f32 %v351, %v110
    %v353 = vadd.f32 %v352, %v120
    %v354 = vadd.f32 %v353, %v130
    %v355 = vadd.f32 %v354, %v140
    %v356 = vsel %vm160, %v150, 0.0
    %v357 = vadd.f32 %v355, %v356
    %v358 = vrot.slane %v357, 4
    %v359 = vadd.f32 %v357, %v358
    %v360 = vrot.slane %v359, 2
    %v361 = vadd.f32 %v359, %v360
    %v362 = vrot.slane %v361, 1
    %v363 = vadd.f32 %v361, %v362
    %v364 = vadd.f32 %v91, %v101
    %v365 = vadd.f32 %v364, %v111
    %v366 = vadd.f32 %v365, %v121
    %v367 = vadd.f32 %v366, %v131
    %v368 = vadd.f32 %v367, %v141
    %v369 = vsel %vm160, %v151, 0.0
    %v370 = vadd.f32 %v368, %v369
    %v371 = vrot.slane %v370, 4
    %v372 = vadd.f32 %v370, %v371
    %v373 = vrot.slane %v372, 2
    %v374 = vadd.f32 %v372, %v373
    %v375 = vrot.slane %v374, 1
    %v376 = vadd.f32 %v374, %v375
    %v377 = vadd.f32 %v92, %v102
    %v378 = vadd.f32 %v377, %v112
    %v379 = vadd.f32 %v378, %v122
    %v380 = vadd.f32 %v379, %v132
    %v381 = vadd.f32 %v380, %v142
    %v382 = vsel %vm160, %v152, 0.0
    %v383 = vadd.f32 %v381, %v382
    %v384 = vrot.slane %v383, 4
    %v385 = vadd.f32 %v383, %v384
    %v386 = vrot.slane %v385, 2
    %v387 = vadd.f32 %v385, %v386
    %v388 = vrot.slane %v387, 1
    %v389 = vadd.f32 %v387, %v388
    %v390 = vadd.f32 %v93, %v103
    %v391 = vadd.f32 %v390, %v113
    %v392 = vadd.f32 %v391, %v123
    %v393 = vadd.f32 %v392, %v133
    %v394 = vadd.f32 %v393, %v143
    %v395 = vsel %vm160, %v153, 0.0
    %v396 = vadd.f32 %v394, %v395
    %v397 = vrot.slane %v396, 4
    %v398 = vadd.f32 %v396, %v397
    %v399 = vrot.slane %v398, 2
    %v400 = vadd.f32 %v398, %v399
    %v401 = vrot.slane %v400, 1
    %v402 = vadd.f32 %v400, %v401
    %v403 = vadd.f32 %v94, %v104
    %v404 = vadd.f32 %v403, %v114
    %v405 = vadd.f32 %v404, %v124
    %v406 = vadd.f32 %v405, %v134
    %v407 = vadd.f32 %v406, %v144
    %v408 = vsel %vm160, %v154, 0.0
    %v409 = vadd.f32 %v407, %v408
    %v410 = vrot.slane %v409, 4
    %v411 = vadd.f32 %v409, %v410
    %v412 = vrot.slane %v411, 2
    %v413 = vadd.f32 %v411, %v412
    %v414 = vrot.slane %v413, 1
    %v415 = vadd.f32 %v413, %v414
    %v416 = vld [vmem:[%s1] sm:$0xff]
    %v417 = vld [vmem:[%s1 + $0x8] sm:$0xff]
    %v418 = vld [vmem:[%s1 + $0x10] sm:$0xff]
    %v419 = vld [vmem:[%s1 + $0x18] sm:$0xff]
    %v420 = vld [vmem:[%s1 + $0x20] sm:$0xff]
    %v421 = vld [vmem:[%s1 + $0x28] sm:$0xff]
    %v422 = vld [vmem:[%s1 + $0x30] sm:$0xff]
    %v423 = vld [vmem:[%s1 + $0x38] sm:$0xff]
    %v424 = vld [vmem:[%s1 + $0x40] sm:$0xff]
    %v425 = vld [vmem:[%s1 + $0x48] sm:$0xff]
    %v426 = vld [vmem:[%s1 + $0x50] sm:$0xff]
    %v427 = vld [vmem:[%s1 + $0x58] sm:$0xff]
    %v428 = vld [vmem:[%s1 + $0x60] sm:$0xff]
    %v429 = vld [vmem:[%s1 + $0x68] sm:$0xff]
    %v430 = vld [vmem:[%s1 + $0x70] sm:$0xff]
    %v431 = vld [vmem:[%s1 + $0x78] sm:$0xff]
    %v432 = vld [vmem:[%s1 + $0x80] sm:$0xff]
    %v433 = vld [vmem:[%s1 + $0x88] sm:$0xff]
    %v434 = vld [vmem:[%s1 + $0x90] sm:$0xff]
    %v435 = vld [vmem:[%s1 + $0x98] sm:$0xff]
    %v436 = vld [vmem:[%s1 + $0xa0] sm:$0xff]
    %v437 = vld [vmem:[%s1 + $0xa8] sm:$0xff]
    %v438 = vld [vmem:[%s1 + $0xb0] sm:$0xff]
    %v439 = vld [vmem:[%s1 + $0xb8] sm:$0xff]
    %v440 = vld [vmem:[%s1 + $0xc0] sm:$0xff]
    %v441 = vld [vmem:[%s1 + $0xc8] sm:$0xff]
    %v442 = vld [vmem:[%s1 + $0xd0] sm:$0xff]
    %v443 = vld [vmem:[%s1 + $0xd8] sm:$0xff]
    %v444 = vld [vmem:[%s1 + $0xe0] sm:$0xff]
    %v445 = vld [vmem:[%s1 + $0xe8] sm:$0xff]
    %v446 = vld [vmem:[%s1 + $0xf0] sm:$0xff]
    %v447 = vld [vmem:[%s1 + $0xf8] sm:$0xff]
    %v448 = vld [vmem:[%s1 + $0x100] sm:$0xff]
    %v449 = vld [vmem:[%s1 + $0x108] sm:$0xff]
    %v450 = vld [vmem:[%s1 + $0x110] sm:$0xff]
    %v451 = vld [vmem:[%s1 + $0x118] sm:$0xff]
    %v452 = vld [vmem:[%s1 + $0x120] sm:$0xff]
    %v453 = vld [vmem:[%s1 + $0x128] sm:$0xff]
    %v454 = vld [vmem:[%s1 + $0x130] sm:$0xff]
    %v455 = vld [vmem:[%s1 + $0x138] sm:$0xff]
    %v456 = vld [vmem:[%s1 + $0x140] sm:$0xff]
    %v457 = vld [vmem:[%s1 + $0x148] sm:$0xff]
    %v458 = vld [vmem:[%s1 + $0x150] sm:$0xff]
    %v459 = vld [vmem:[%s1 + $0x158] sm:$0xff]
    %v460 = vld [vmem:[%s1 + $0x160] sm:$0xff]
    %v461 = vld [vmem:[%s1 + $0x168] sm:$0xff]
    %v462 = vld [vmem:[%s1 + $0x170] sm:$0xff]
    %v463 = vld [vmem:[%s1 + $0x178] sm:$0xff]
    %v464 = vld [vmem:[%s1 + $0x180] sm:$0xff]
    %v465 = vld [vmem:[%s1 + $0x188] sm:$0xff]
    %v466 = vld [vmem:[%s1 + $0x190] sm:$0xff]
    %v467 = vld [vmem:[%s1 + $0x198] sm:$0xff]
    %v468 = vld [vmem:[%s1 + $0x1a0] sm:$0xff]
    %v469 = vld [vmem:[%s1 + $0x1a8] sm:$0xff]
    %v470 = vld [vmem:[%s1 + $0x1b0] sm:$0xff]
    %v471 = vld [vmem:[%s1 + $0x1b8] sm:$0xff]
    %v472 = vld [vmem:[%s1 + $0x1c0] sm:$0xff]
    %v473 = vld [vmem:[%s1 + $0x1c8] sm:$0xff]
    %v474 = vld [vmem:[%s1 + $0x1d0] sm:$0xff]
    %v475 = vld [vmem:[%s1 + $0x1d8] sm:$0xff]
    %v476 = vld [vmem:[%s1 + $0x1e0] sm:$0xff]
    %v477 = vld [vmem:[%s1 + $0x1e8] sm:$0xff]
    %v478 = vld [vmem:[%s1 + $0x1f0] sm:$0xff]
    %v479 = vld [vmem:[%s1 + $0x1f8] sm:$0xff]
    %v480 = vld [vmem:[%s1 + $0x200] sm:$0xff]
    %v481 = vld [vmem:[%s1 + $0x208] sm:$0xff]
    %v482 = vld [vmem:[%s1 + $0x210] sm:$0xff]
    %v483 = vld [vmem:[%s1 + $0x218] sm:$0xff]
    %v484 = vld [vmem:[%s1 + $0x220] sm:$0xff]
    %v485 = vld [vmem:[%s1 + $0x228] sm:$0xff]
    %v486 = vld [vmem:[%s1 + $0x230] sm:$0xff]
    %v487 = vld [vmem:[%s1 + $0x238] sm:$0xff]
    %v488 = vld [vmem:[%s1 + $0x240] sm:$0xff]
    %v489 = vld [vmem:[%s1 + $0x248] sm:$0xff]
    %v490 = vld [vmem:[%s1 + $0x250] sm:$0xff]
    %v491 = vld [vmem:[%s1 + $0x258] sm:$0xff]
    %v492 = vld [vmem:[%s1 + $0x260] sm:$0xff]
    %v493 = vld [vmem:[%s1 + $0x268] sm:$0xff]
    %v494 = vld [vmem:[%s1 + $0x270] sm:$0xff]
    %v495 = vld [vmem:[%s1 + $0x278] sm:$0xff]
    %v496 = vld [vmem:[%s1 + $0x280] sm:$0xff]
    %v497 = vld [vmem:[%s1 + $0x288] sm:$0xff]
    %v498 = vld [vmem:[%s1 + $0x290] sm:$0xff]
    %v499 = vld [vmem:[%s1 + $0x298] sm:$0xff]
    %v500 = vld [vmem:[%s1 + $0x2a0] sm:$0xff]
    %v501 = vld [vmem:[%s1 + $0x2a8] sm:$0xff]
    %v502 = vld [vmem:[%s1 + $0x2b0] sm:$0xff]
    %v503 = vld [vmem:[%s1 + $0x2b8] sm:$0xff]
    %v504 = vld [vmem:[%s1 + $0x2c0] sm:$0xff]
    %v505 = vld [vmem:[%s1 + $0x2c8] sm:$0xff]
    %v506 = vld [vmem:[%s1 + $0x2d0] sm:$0xff]
    %v507 = vld [vmem:[%s1 + $0x2d8] sm:$0xff]
    %v508 = vld [vmem:[%s1 + $0x2e0] sm:$0xff]
    %v509 = vld [vmem:[%s1 + $0x2e8] sm:$0xff]
    %v510 = vld [vmem:[%s1 + $0x2f0] sm:$0xff]
    %v511 = vld [vmem:[%s1 + $0x2f8] sm:$0xff]
    %v512 = vld [vmem:[%s1 + $0x300] sm:$0xff]
    %v513 = vld [vmem:[%s1 + $0x308] sm:$0xff]
    %v514 = vld [vmem:[%s1 + $0x310] sm:$0xff]
    %v515 = vld [vmem:[%s1 + $0x318] sm:$0xff]
    %v516 = vld [vmem:[%s1 + $0x320] sm:$0xff]
    %v517 = vld [vmem:[%s1 + $0x328] sm:$0xff]
    %v518 = vld [vmem:[%s1 + $0x330] sm:$0xff]
    %v519 = vld [vmem:[%s1 + $0x338] sm:$0xff]
    %v520 = vld [vmem:[%s1 + $0x340] sm:$0xff]
    %v521 = vld [vmem:[%s1 + $0x348] sm:$0xff]
    %v522 = vld [vmem:[%s1 + $0x350] sm:$0xff]
    %v523 = vld [vmem:[%s1 + $0x358] sm:$0xff]
    %v524 = vld [vmem:[%s1 + $0x360] sm:$0xff]
    %v525 = vld [vmem:[%s1 + $0x368] sm:$0xff]
    %v526 = vld [vmem:[%s1 + $0x370] sm:$0xff]
    %v527 = vld [vmem:[%s1 + $0x378] sm:$0xff]
    %v528 = vld [vmem:[%s1 + $0x380] sm:$0xff]
    %v529 = vld [vmem:[%s1 + $0x388] sm:$0xff]
    %v530 = vld [vmem:[%s1 + $0x390] sm:$0xff]
    %v531 = vld [vmem:[%s1 + $0x398] sm:$0xff]
    %v532 = vld [vmem:[%s1 + $0x3a0] sm:$0xff]
    %v533 = vld [vmem:[%s1 + $0x3a8] sm:$0xff]
    %v534 = vld [vmem:[%s1 + $0x3b0] sm:$0xff]
    %v535 = vld [vmem:[%s1 + $0x3b8] sm:$0xff]
    %v536 = vld [vmem:[%s1 + $0x3c0] sm:$0xff]
    %v537 = vld [vmem:[%s1 + $0x3c8] sm:$0xff]
    %v538 = vld [vmem:[%s1 + $0x3d0] sm:$0xff]
    %v539 = vld [vmem:[%s1 + $0x3d8] sm:$0xff]
    %v540 = vld [vmem:[%s1 + $0x3e0] sm:$0xff]
    %v541 = vld [vmem:[%s1 + $0x3e8] sm:$0xff]
    %v542 = vld [vmem:[%s1 + $0x3f0] sm:$0xff]
    %v543 = vld [vmem:[%s1 + $0x3f8] sm:$0xff]
    %v544 = vld [vmem:[%s1 + $0x400] sm:$0xff]
    %v545 = vld [vmem:[%s1 + $0x408] sm:$0xff]
    %v546 = vld [vmem:[%s1 + $0x410] sm:$0xff]
    %v547 = vld [vmem:[%s1 + $0x418] sm:$0xff]
    %v548 = vld [vmem:[%s1 + $0x420] sm:$0xff]
    %v549 = vld [vmem:[%s1 + $0x428] sm:$0xff]
    %v550 = vld [vmem:[%s1 + $0x430] sm:$0xff]
    %v551 = vld [vmem:[%s1 + $0x438] sm:$0xff]
    %v552 = vld [vmem:[%s1 + $0x440] sm:$0xff]
    %v553 = vld [vmem:[%s1 + $0x448] sm:$0xff]
    %v554 = vld [vmem:[%s1 + $0x450] sm:$0xff]
    %v555 = vld [vmem:[%s1 + $0x458] sm:$0xff]
    %v556 = vld [vmem:[%s1 + $0x460] sm:$0xff]
    %v557 = vld [vmem:[%s1 + $0x468] sm:$0xff]
    %v558 = vld [vmem:[%s1 + $0x470] sm:$0xff]
    %v559 = vld [vmem:[%s1 + $0x478] sm:$0xff]
    %v560 = vld [vmem:[%s1 + $0x480] sm:$0xff]
    %v561 = vld [vmem:[%s1 + $0x488] sm:$0xff]
    %v562 = vld [vmem:[%s1 + $0x490] sm:$0xff]
    %v563 = vld [vmem:[%s1 + $0x498] sm:$0xff]
    %v564 = vld [vmem:[%s1 + $0x4a0] sm:$0xff]
    %v565 = vld [vmem:[%s1 + $0x4a8] sm:$0xff]
    %v566 = vld [vmem:[%s1 + $0x4b0] sm:$0xff]
    %v567 = vld [vmem:[%s1 + $0x4b8] sm:$0xff]
    %v568 = vld [vmem:[%s1 + $0x4c0] sm:$0xff]
    %v569 = vld [vmem:[%s1 + $0x4c8] sm:$0xff]
    %v570 = vld [vmem:[%s1 + $0x4d0] sm:$0xff]
    %v571 = vld [vmem:[%s1 + $0x4d8] sm:$0xff]
    %v572 = vld [vmem:[%s1 + $0x4e0] sm:$0xff]
    %v573 = vld [vmem:[%s1 + $0x4e8] sm:$0xff]
    %v574 = vld [vmem:[%s1 + $0x4f0] sm:$0xff]
    %v575 = vld [vmem:[%s1 + $0x4f8] sm:$0xff]
    %v576 = vld [vmem:[%s2] sm:$0x1]
    %v578 = vlaneseq
    %v579 = vshrl.u32 %v578, 7
    %v580 = vsub.s32 0, %v579
    %v581 = vrot.slane %v576, %v580
    %vm603 = vcmask 1041409
    %v604 = vsel %vm603, %v298, %v168
    %v605 = vsel %vm603, %v311, %v181
    %v606 = vsel %vm603, %v324, %v194
    %v607 = vsel %vm603, %v337, %v207
    %v608 = vsel %vm603, %v350, %v220
    %v609 = vsel %vm603, %v363, %v233
    %v610 = vsel %vm603, %v376, %v246
    %v611 = vsel %vm603, %v389, %v259
    %v612 = vsel %vm603, %v402, %v272
    %v613 = vsel %vm603, %v415, %v285
    %624 = vmatprep.subr.mxu0 0.0
    %625 = vmatpush1.msra.mxu0 %v431
    %626 = vmatprep.subr.mxu0 0.0
    %627 = vmatpush1.msra.mxu0 %v430
    %628 = vmatprep.subr.mxu0 0.0
    %629 = vmatpush1.msra.mxu0 %v429
    %630 = vmatprep.subr.mxu0 0.0
    %631 = vmatpush1.msra.mxu0 %v428
    %632 = vmatprep.subr.mxu0 0.0
    %633 = vmatpush1.msra.mxu0 %v427
    %634 = vmatprep.subr.mxu0 0.0
    %635 = vmatpush1.msra.mxu0 %v426
    %636 = vmatprep.subr.mxu0 0.0
    %637 = vmatpush1.msra.mxu0 %v425
    %638 = vmatprep.subr.mxu0 0.0
    %639 = vmatpush1.msra.mxu0 %v424
    %640 = vmatprep.subr.mxu0 0.0
    %641 = vmatpush1.msra.mxu0 %v423
    %642 = vmatprep.subr.mxu0 0.0
    %643 = vmatpush1.msra.mxu0 %v422
    %644 = vmatprep.subr.mxu0 0.0
    %645 = vmatpush1.msra.mxu0 %v421
    %646 = vmatprep.subr.mxu0 0.0
    %647 = vmatpush1.msra.mxu0 %v420
    %648 = vmatprep.subr.mxu0 0.0
    %649 = vmatpush1.msra.mxu0 %v419
    %650 = vmatprep.subr.mxu0 0.0
    %651 = vmatpush1.msra.mxu0 %v418
    %652 = vmatprep.subr.mxu0 0.0
    %653 = vmatpush1.msra.mxu0 %v417
    %654 = vmatprep.subr.mxu0 0.0
    %655 = vmatpush1.msra.mxu0 %v416
    %656 = vmatprep.subr.mxu0 0.0
    %657 = vmatpush2.msra.mxu0 %v447
    %658 = vmatprep.subr.mxu0 0.0
    %659 = vmatpush2.msra.mxu0 %v446
    %660 = vmatprep.subr.mxu0 0.0
    %661 = vmatpush2.msra.mxu0 %v445
    %662 = vmatprep.subr.mxu0 0.0
    %663 = vmatpush2.msra.mxu0 %v444
    %664 = vmatprep.subr.mxu0 0.0
    %665 = vmatpush2.msra.mxu0 %v443
    %666 = vmatprep.subr.mxu0 0.0
    %667 = vmatpush2.msra.mxu0 %v442
    %668 = vmatprep.subr.mxu0 0.0
    %669 = vmatpush2.msra.mxu0 %v441
    %670 = vmatprep.subr.mxu0 0.0
    %671 = vmatpush2.msra.mxu0 %v440
    %672 = vmatprep.subr.mxu0 0.0
    %673 = vmatpush2.msra.mxu0 %v439
    %674 = vmatprep.subr.mxu0 0.0
    %675 = vmatpush2.msra.mxu0 %v438
    %676 = vmatprep.subr.mxu0 0.0
    %677 = vmatpush2.msra.mxu0 %v437
    %678 = vmatprep.subr.mxu0 0.0
    %679 = vmatpush2.msra.mxu0 %v436
    %680 = vmatprep.subr.mxu0 0.0
    %681 = vmatpush2.msra.mxu0 %v435
    %682 = vmatprep.subr.mxu0 0.0
    %683 = vmatpush2.msra.mxu0 %v434
    %684 = vmatprep.subr.mxu0 0.0
    %685 = vmatpush2.msra.mxu0 %v433
    %686 = vmatprep.subr.mxu0 0.0
    %687 = vmatpush2.msra.mxu0 %v432
    %688 = vmatprep.mubr.f32.mxu0 %v605
    %689 = vmatmul.mubr.f32.gmra.mxu0 %v604
    %v690 = vpop.f32.mrf.mxu0
    %v691 = vadd.f32 %v581, %v690
    %v692 = vpop.f32.mrf.mxu0
    %693 = vdwg.mxu0
    %694 = vmatprep.subr.mxu0 0.0
    %695 = vmatpush1.msra.mxu0 %v463
    %696 = vmatprep.subr.mxu0 0.0
    %697 = vmatpush1.msra.mxu0 %v462
    %698 = vmatprep.subr.mxu0 0.0
    %699 = vmatpush1.msra.mxu0 %v461
    %700 = vmatprep.subr.mxu0 0.0
    %701 = vmatpush1.msra.mxu0 %v460
    %702 = vmatprep.subr.mxu0 0.0
    %703 = vmatpush1.msra.mxu0 %v459
    %704 = vmatprep.subr.mxu0 0.0
    %705 = vmatpush1.msra.mxu0 %v458
    %706 = vmatprep.subr.mxu0 0.0
    %707 = vmatpush1.msra.mxu0 %v457
    %708 = vmatprep.subr.mxu0 0.0
    %709 = vmatpush1.msra.mxu0 %v456
    %710 = vmatprep.subr.mxu0 0.0
    %711 = vmatpush1.msra.mxu0 %v455
    %712 = vmatprep.subr.mxu0 0.0
    %713 = vmatpush1.msra.mxu0 %v454
    %714 = vmatprep.subr.mxu0 0.0
    %715 = vmatpush1.msra.mxu0 %v453
    %716 = vmatprep.subr.mxu0 0.0
    %717 = vmatpush1.msra.mxu0 %v452
    %718 = vmatprep.subr.mxu0 0.0
    %719 = vmatpush1.msra.mxu0 %v451
    %720 = vmatprep.subr.mxu0 0.0
    %721 = vmatpush1.msra.mxu0 %v450
    %722 = vmatprep.subr.mxu0 0.0
    %723 = vmatpush1.msra.mxu0 %v449
    %724 = vmatprep.subr.mxu0 0.0
    %725 = vmatpush1.msra.mxu0 %v448
    %726 = vmatprep.subr.mxu0 0.0
    %727 = vmatpush2.msra.mxu0 %v479
    %728 = vmatprep.subr.mxu0 0.0
    %729 = vmatpush2.msra.mxu0 %v478
    %730 = vmatprep.subr.mxu0 0.0
    %731 = vmatpush2.msra.mxu0 %v477
    %732 = vmatprep.subr.mxu0 0.0
    %733 = vmatpush2.msra.mxu0 %v476
    %734 = vmatprep.subr.mxu0 0.0
    %735 = vmatpush2.msra.mxu0 %v475
    %736 = vmatprep.subr.mxu0 0.0
    %737 = vmatpush2.msra.mxu0 %v474
    %738 = vmatprep.subr.mxu0 0.0
    %739 = vmatpush2.msra.mxu0 %v473
    %740 = vmatprep.subr.mxu0 0.0
    %741 = vmatpush2.msra.mxu0 %v472
    %742 = vmatprep.subr.mxu0 0.0
    %743 = vmatpush2.msra.mxu0 %v471
    %744 = vmatprep.subr.mxu0 0.0
    %745 = vmatpush2.msra.mxu0 %v470
    %746 = vmatprep.subr.mxu0 0.0
    %747 = vmatpush2.msra.mxu0 %v469
    %748 = vmatprep.subr.mxu0 0.0
    %749 = vmatpush2.msra.mxu0 %v468
    %750 = vmatprep.subr.mxu0 0.0
    %751 = vmatpush2.msra.mxu0 %v467
    %752 = vmatprep.subr.mxu0 0.0
    %753 = vmatpush2.msra.mxu0 %v466
    %754 = vmatprep.subr.mxu0 0.0
    %755 = vmatpush2.msra.mxu0 %v465
    %756 = vmatprep.subr.mxu0 0.0
    %757 = vmatpush2.msra.mxu0 %v464
    %758 = vmatprep.mubr.f32.mxu0 %v607
    %759 = vmatmul.mubr.f32.gmra.mxu0 %v606
    %v760 = vpop.f32.mrf.mxu0
    %v761 = vadd.f32 %v691, %v760
    %v762 = vpop.f32.mrf.mxu0
    %763 = vdwg.mxu0
    %764 = vmatprep.subr.mxu0 0.0
    %765 = vmatpush1.msra.mxu0 %v495
    %766 = vmatprep.subr.mxu0 0.0
    %767 = vmatpush1.msra.mxu0 %v494
    %768 = vmatprep.subr.mxu0 0.0
    %769 = vmatpush1.msra.mxu0 %v493
    %770 = vmatprep.subr.mxu0 0.0
    %771 = vmatpush1.msra.mxu0 %v492
    %772 = vmatprep.subr.mxu0 0.0
    %773 = vmatpush1.msra.mxu0 %v491
    %774 = vmatprep.subr.mxu0 0.0
    %775 = vmatpush1.msra.mxu0 %v490
    %776 = vmatprep.subr.mxu0 0.0
    %777 = vmatpush1.msra.mxu0 %v489
    %778 = vmatprep.subr.mxu0 0.0
    %779 = vmatpush1.msra.mxu0 %v488
    %780 = vmatprep.subr.mxu0 0.0
    %781 = vmatpush1.msra.mxu0 %v487
    %782 = vmatprep.subr.mxu0 0.0
    %783 = vmatpush1.msra.mxu0 %v486
    %784 = vmatprep.subr.mxu0 0.0
    %785 = vmatpush1.msra.mxu0 %v485
    %786 = vmatprep.subr.mxu0 0.0
    %787 = vmatpush1.msra.mxu0 %v484
    %788 = vmatprep.subr.mxu0 0.0
    %789 = vmatpush1.msra.mxu0 %v483
    %790 = vmatprep.subr.mxu0 0.0
    %791 = vmatpush1.msra.mxu0 %v482
    %792 = vmatprep.subr.mxu0 0.0
    %793 = vmatpush1.msra.mxu0 %v481
    %794 = vmatprep.subr.mxu0 0.0
    %795 = vmatpush1.msra.mxu0 %v480
    %796 = vmatprep.subr.mxu0 0.0
    %797 = vmatpush2.msra.mxu0 %v511
    %798 = vmatprep.subr.mxu0 0.0
    %799 = vmatpush2.msra.mxu0 %v510
    %800 = vmatprep.subr.mxu0 0.0
    %801 = vmatpush2.msra.mxu0 %v509
    %802 = vmatprep.subr.mxu0 0.0
    %803 = vmatpush2.msra.mxu0 %v508
    %804 = vmatprep.subr.mxu0 0.0
    %805 = vmatpush2.msra.mxu0 %v507
    %806 = vmatprep.subr.mxu0 0.0
    %807 = vmatpush2.msra.mxu0 %v506
    %808 = vmatprep.subr.mxu0 0.0
    %809 = vmatpush2.msra.mxu0 %v505
    %810 = vmatprep.subr.mxu0 0.0
    %811 = vmatpush2.msra.mxu0 %v504
    %812 = vmatprep.subr.mxu0 0.0
    %813 = vmatpush2.msra.mxu0 %v503
    %814 = vmatprep.subr.mxu0 0.0
    %815 = vmatpush2.msra.mxu0 %v502
    %816 = vmatprep.subr.mxu0 0.0
    %817 = vmatpush2.msra.mxu0 %v501
    %818 = vmatprep.subr.mxu0 0.0
    %819 = vmatpush2.msra.mxu0 %v500
    %820 = vmatprep.subr.mxu0 0.0
    %821 = vmatpush2.msra.mxu0 %v499
    %822 = vmatprep.subr.mxu0 0.0
    %823 = vmatpush2.msra.mxu0 %v498
    %824 = vmatprep.subr.mxu0 0.0
    %825 = vmatpush2.msra.mxu0 %v497
    %826 = vmatprep.subr.mxu0 0.0
    %827 = vmatpush2.msra.mxu0 %v496
    %828 = vmatprep.mubr.f32.mxu0 %v609
    %829 = vmatmul.mubr.f32.gmra.mxu0 %v608
    %v830 = vpop.f32.mrf.mxu0
    %v831 = vadd.f32 %v761, %v830
    %v832 = vpop.f32.mrf.mxu0
    %833 = vdwg.mxu0
    %834 = vmatprep.subr.mxu0 0.0
    %835 = vmatpush1.msra.mxu0 %v527
    %836 = vmatprep.subr.mxu0 0.0
    %837 = vmatpush1.msra.mxu0 %v526
    %838 = vmatprep.subr.mxu0 0.0
    %839 = vmatpush1.msra.mxu0 %v525
    %840 = vmatprep.subr.mxu0 0.0
    %841 = vmatpush1.msra.mxu0 %v524
    %842 = vmatprep.subr.mxu0 0.0
    %843 = vmatpush1.msra.mxu0 %v523
    %844 = vmatprep.subr.mxu0 0.0
    %845 = vmatpush1.msra.mxu0 %v522
    %846 = vmatprep.subr.mxu0 0.0
    %847 = vmatpush1.msra.mxu0 %v521
    %848 = vmatprep.subr.mxu0 0.0
    %849 = vmatpush1.msra.mxu0 %v520
    %850 = vmatprep.subr.mxu0 0.0
    %851 = vmatpush1.msra.mxu0 %v519
    %852 = vmatprep.subr.mxu0 0.0
    %853 = vmatpush1.msra.mxu0 %v518
    %854 = vmatprep.subr.mxu0 0.0
    %855 = vmatpush1.msra.mxu0 %v517
    %856 = vmatprep.subr.mxu0 0.0
    %857 = vmatpush1.msra.mxu0 %v516
    %858 = vmatprep.subr.mxu0 0.0
    %859 = vmatpush1.msra.mxu0 %v515
    %860 = vmatprep.subr.mxu0 0.0
    %861 = vmatpush1.msra.mxu0 %v514
    %862 = vmatprep.subr.mxu0 0.0
    %863 = vmatpush1.msra.mxu0 %v513
    %864 = vmatprep.subr.mxu0 0.0
    %865 = vmatpush1.msra.mxu0 %v512
    %866 = vmatprep.subr.mxu0 0.0
    %867 = vmatpush2.msra.mxu0 %v543
    %868 = vmatprep.subr.mxu0 0.0
    %869 = vmatpush2.msra.mxu0 %v542
    %870 = vmatprep.subr.mxu0 0.0
    %871 = vmatpush2.msra.mxu0 %v541
    %872 = vmatprep.subr.mxu0 0.0
    %873 = vmatpush2.msra.mxu0 %v540
    %874 = vmatprep.subr.mxu0 0.0
    %875 = vmatpush2.msra.mxu0 %v539
    %876 = vmatprep.subr.mxu0 0.0
    %877 = vmatpush2.msra.mxu0 %v538
    %878 = vmatprep.subr.mxu0 0.0
    %879 = vmatpush2.msra.mxu0 %v537
    %880 = vmatprep.subr.mxu0 0.0
    %881 = vmatpush2.msra.mxu0 %v536
    %882 = vmatprep.subr.mxu0 0.0
    %883 = vmatpush2.msra.mxu0 %v535
    %884 = vmatprep.subr.mxu0 0.0
    %885 = vmatpush2.msra.mxu0 %v534
    %886 = vmatprep.subr.mxu0 0.0
    %887 = vmatpush2.msra.mxu0 %v533
    %888 = vmatprep.subr.mxu0 0.0
    %889 = vmatpush2.msra.mxu0 %v532
    %890 = vmatprep.subr.mxu0 0.0
    %891 = vmatpush2.msra.mxu0 %v531
    %892 = vmatprep.subr.mxu0 0.0
    %893 = vmatpush2.msra.mxu0 %v530
    %894 = vmatprep.subr.mxu0 0.0
    %895 = vmatpush2.msra.mxu0 %v529
    %896 = vmatprep.subr.mxu0 0.0
    %897 = vmatpush2.msra.mxu0 %v528
    %898 = vmatprep.mubr.f32.mxu0 %v611
    %899 = vmatmul.mubr.f32.gmra.mxu0 %v610
    %v900 = vpop.f32.mrf.mxu0
    %v901 = vadd.f32 %v831, %v900
    %v902 = vpop.f32.mrf.mxu0
    %903 = vdwg.mxu0
    %904 = vmatprep.subr.mxu0 0.0
    %905 = vmatpush1.msra.mxu0 %v559
    %906 = vmatprep.subr.mxu0 0.0
    %907 = vmatpush1.msra.mxu0 %v558
    %908 = vmatprep.subr.mxu0 0.0
    %909 = vmatpush1.msra.mxu0 %v557
    %910 = vmatprep.subr.mxu0 0.0
    %911 = vmatpush1.msra.mxu0 %v556
    %912 = vmatprep.subr.mxu0 0.0
    %913 = vmatpush1.msra.mxu0 %v555
    %914 = vmatprep.subr.mxu0 0.0
    %915 = vmatpush1.msra.mxu0 %v554
    %916 = vmatprep.subr.mxu0 0.0
    %917 = vmatpush1.msra.mxu0 %v553
    %918 = vmatprep.subr.mxu0 0.0
    %919 = vmatpush1.msra.mxu0 %v552
    %920 = vmatprep.subr.mxu0 0.0
    %921 = vmatpush1.msra.mxu0 %v551
    %922 = vmatprep.subr.mxu0 0.0
    %923 = vmatpush1.msra.mxu0 %v550
    %924 = vmatprep.subr.mxu0 0.0
    %925 = vmatpush1.msra.mxu0 %v549
    %926 = vmatprep.subr.mxu0 0.0
    %927 = vmatpush1.msra.mxu0 %v548
    %928 = vmatprep.subr.mxu0 0.0
    %929 = vmatpush1.msra.mxu0 %v547
    %930 = vmatprep.subr.mxu0 0.0
    %931 = vmatpush1.msra.mxu0 %v546
    %932 = vmatprep.subr.mxu0 0.0
    %933 = vmatpush1.msra.mxu0 %v545
    %934 = vmatprep.subr.mxu0 0.0
    %935 = vmatpush1.msra.mxu0 %v544
    %936 = vmatprep.subr.mxu0 0.0
    %937 = vmatpush2.msra.mxu0 %v575
    %938 = vmatprep.subr.mxu0 0.0
    %939 = vmatpush2.msra.mxu0 %v574
    %940 = vmatprep.subr.mxu0 0.0
    %941 = vmatpush2.msra.mxu0 %v573
    %942 = vmatprep.subr.mxu0 0.0
    %943 = vmatpush2.msra.mxu0 %v572
    %944 = vmatprep.subr.mxu0 0.0
    %945 = vmatpush2.msra.mxu0 %v571
    %946 = vmatprep.subr.mxu0 0.0
    %947 = vmatpush2.msra.mxu0 %v570
    %948 = vmatprep.subr.mxu0 0.0
    %949 = vmatpush2.msra.mxu0 %v569
    %950 = vmatprep.subr.mxu0 0.0
    %951 = vmatpush2.msra.mxu0 %v568
    %952 = vmatprep.subr.mxu0 0.0
    %953 = vmatpush2.msra.mxu0 %v567
    %954 = vmatprep.subr.mxu0 0.0
    %955 = vmatpush2.msra.mxu0 %v566
    %956 = vmatprep.subr.mxu0 0.0
    %957 = vmatpush2.msra.mxu0 %v565
    %958 = vmatprep.subr.mxu0 0.0
    %959 = vmatpush2.msra.mxu0 %v564
    %960 = vmatprep.subr.mxu0 0.0
    %961 = vmatpush2.msra.mxu0 %v563
    %962 = vmatprep.subr.mxu0 0.0
    %963 = vmatpush2.msra.mxu0 %v562
    %964 = vmatprep.subr.mxu0 0.0
    %965 = vmatpush2.msra.mxu0 %v561
    %966 = vmatprep.subr.mxu0 0.0
    %967 = vmatpush2.msra.mxu0 %v560
    %968 = vmatprep.mubr.f32.mxu0 %v613
    %969 = vmatmul.mubr.f32.gmra.mxu0 %v612
    %v970 = vpop.f32.mrf.mxu0
    %v971 = vadd.f32 %v901, %v970
    %v972 = vpop.f32.mrf.mxu0
    %973 = vdwg.mxu0
    %974 = vst [vmem:[#allocation2] sm:$0x3] %v971
    // Predicated region
    $region14: #{classifier_head.1} parent=1 // pred_check
      _
    $region15: #{classifier_head.1} parent=1 // pred_check_branch
      %976 = sbr.rel (0) target = $region17
    $region16: #{classifier_head.1} parent=1 // pred_region
      %s978 = ssub.s32 32, 32
      %979 = vsyncadd [#allocation3], %s978
      %s981 = sshll.u32 [#allocation2], 4
      %s982 = int_to_ptr.vmem [resolvable:$true] %s981
      %984 = dma.vmem_to_hbm [thread:$0]  %s982, 32, %s3, [#allocation3]
    $region17: #{classifier_head.1} parent=1 // pred_fallthru
      _
    // Predicated region
    $region18: #{classifier_head.1} parent=1 // pred_check
      _
    $region19: #{classifier_head.1} parent=1 // pred_check_branch
      %986 = sbr.rel (0) target = $region21
    $region20: #{classifier_head.1} parent=1 // pred_region
      %987 = dma.done [#allocation3], 32
    $region21: #{classifier_head.1} parent=1 // pred_fallthru
      _
    %988 = vsyncpa [#allocation3], 1

</llo_original>
